<compile_context>
chip_gen: v5e
topology: v5e:2x2
jax: 0.10.0
libtpu: 0.0.40
codegen_flags: <defaults>
</compile_context>

<pallas_src>
import jax
import jax.numpy as jnp
from jax.experimental import pallas as pl
from jax.experimental.pallas import tpu as pltpu

STATE_DIM = 2
ACTION_DIM = 2
IN_DIM = STATE_DIM + ACTION_DIM
IN_PAD = 8          # features padded to 8: [s0, s1, a0, a1, 1 (bias), 0, 0, 0]
HIDDEN_DIM = 256
W3_PAD = 8          # w3 row padded to 8 sublanes for the final MXU matmul


def reward_mlp_kernel(x_ref, w1_ref, w2_ref, b2_ref, w3_ref, b3_ref, out_ref):
    # x_ref : [8, TB]   bf16   (rows 0-3 = features, row 4 = ones for b1)
    # w1_ref: [256, 8]  bf16   (cols 0-3 = W1, col 4 = b1)
    # w2_ref: [256,256] bf16
    # b2_ref: [256, 1]  f32
    # w3_ref: [8, 256]  bf16   (row 0 = W3, rest zero)
    # b3_ref: [1, 1]    f32 in SMEM
    # out   : [1, TB]   f32    (lane-dense reward row)

    # Layer 1 (+ folded bias) on the MXU: [256,8] @ [8,TB] -> [256,TB] f32.
    h1 = jnp.dot(w1_ref[...], x_ref[...], preferred_element_type=jnp.float32)
    h1 = jnp.maximum(h1, 0.0).astype(jnp.bfloat16)

    # Layer 2 on the MXU: [256,256] @ [256,TB] -> [256,TB] f32, bias on lanes.
    h2 = jnp.dot(w2_ref[...], h1, preferred_element_type=jnp.float32) + b2_ref[...]
    h2 = jnp.maximum(h2, 0.0).astype(jnp.bfloat16)

    # Layer 3 on the MXU (replaces the XLU lane reduction): [8,256] @ [256,TB].
    r = jnp.dot(w3_ref[...], h2, preferred_element_type=jnp.float32)   # [8, TB]
    out_ref[...] = (r[0:1, :] + b3_ref[0, 0]).astype(out_ref.dtype)


def _round_up(x, m):
    return (x + m - 1) // m * m


def reward_network_forward(state, action, params, *, block_b=2048):
    """state: [B, 2] f32, action: [B, 2] f32 -> [B, 1] f32."""
    B = state.shape[0]

    # Batch tile: multiple of 128 (lane width), clamped to the batch, and kept
    # small enough that the grid has >= 2 steps when possible (v7x megacore).
    bp_min = _round_up(B, 128)
    TB = max(128, min(_round_up(block_b, 128), bp_min))
    if bp_min >= 2 * 128 and bp_min // TB < 2:
        TB = _round_up((bp_min + 1) // 2, 128)
    Bp = _round_up(B, TB)

    # Single augmented input: [B, 8] = [state, action, 1, 0, 0, 0]; the ones
    # column folds b1 into the layer-1 matmul.  Transpose -> batch on lanes.
    x = jnp.concatenate([state.astype(jnp.float32),
                         action.astype(jnp.float32)], axis=1)           # [B, 4]
    x_aug = jnp.concatenate(
        [x, jnp.ones((B, 1), jnp.float32),
         jnp.zeros((B, IN_PAD - IN_DIM - 1), jnp.float32)], axis=1)     # [B, 8]
    if Bp != B:
        x_aug = jnp.pad(x_aug, ((0, Bp - B), (0, 0)))
    xT = x_aug.T.astype(jnp.bfloat16)                                   # [8, Bp]

    # Weights kept in PyTorch [out, in] layout -> y = W @ x directly.
    w1 = params["w1"].astype(jnp.float32)                               # [256, 4]
    b1 = params["b1"].astype(jnp.float32)                               # [256]
    w1p = jnp.zeros((HIDDEN_DIM, IN_PAD), jnp.float32)
    w1p = w1p.at[:, :IN_DIM].set(w1).at[:, IN_DIM].set(b1)
    w1p = w1p.astype(jnp.bfloat16)                                      # [256, 8]

    w2 = params["w2"].astype(jnp.bfloat16)                              # [256, 256]
    b2 = params["b2"].reshape(HIDDEN_DIM, 1).astype(jnp.float32)        # [256, 1]

    w3 = params["w3"].reshape(1, HIDDEN_DIM).astype(jnp.float32)        # [1, 256]
    w3p = jnp.zeros((W3_PAD, HIDDEN_DIM), jnp.float32).at[0:1, :].set(w3)
    w3p = w3p.astype(jnp.bfloat16)                                      # [8, 256]
    b3 = params["b3"].reshape(1, 1).astype(jnp.float32)                 # [1, 1]

    resident = lambda i: (0, 0)   # same block every step -> stays in VMEM

    out = pl.pallas_call(
        reward_mlp_kernel,
        out_shape=jax.ShapeDtypeStruct((1, Bp), jnp.float32),
        grid=(Bp // TB,),
        in_specs=[
            pl.BlockSpec((IN_PAD, TB), lambda i: (0, i)),               # xT tile
            pl.BlockSpec((HIDDEN_DIM, IN_PAD), resident),               # w1p
            pl.BlockSpec((HIDDEN_DIM, HIDDEN_DIM), resident),           # w2
            pl.BlockSpec((HIDDEN_DIM, 1), resident),                    # b2
            pl.BlockSpec((W3_PAD, HIDDEN_DIM), resident),               # w3p
            pl.BlockSpec(memory_space=pltpu.MemorySpace.SMEM),          # b3
        ],
        out_specs=pl.BlockSpec((1, TB), lambda i: (0, i)),
        compiler_params=pltpu.CompilerParams(
            dimension_semantics=("parallel",),
        ),
    )(xT, w1p, w2, b2, w3p, b3)

    return out.reshape(Bp, 1)[:B]


def init_params(key):
    """Deterministic synthetic init; PyTorch [out, in] weight layout."""
    ks = jax.random.split(key, 6)
    w1 = jax.random.normal(ks[0], (HIDDEN_DIM, IN_DIM), jnp.float32) * 0.1
    b1 = jax.random.normal(ks[1], (HIDDEN_DIM,), jnp.float32) * 0.01
    w2 = jax.random.normal(ks[2], (HIDDEN_DIM, HIDDEN_DIM), jnp.float32) * 0.05
    b2 = jax.random.normal(ks[3], (HIDDEN_DIM,), jnp.float32) * 0.01
    w3 = jax.random.normal(ks[4], (1, HIDDEN_DIM), jnp.float32) * 0.05
    b3 = jax.random.normal(ks[5], (1,), jnp.float32) * 0.01
    return dict(w1=w1, b1=b1, w2=w2, b2=b2, w3=w3, b3=b3)


def reference_forward(state, action, params):
    x = jnp.concatenate([state, action], axis=1)
    h1 = jnp.maximum(x @ params["w1"].T + params["b1"], 0.0)
    h2 = jnp.maximum(h1 @ params["w2"].T + params["b2"], 0.0)
    return h2 @ params["w3"].T + params["b3"]


if __name__ == "__main__":
    key = jax.random.PRNGKey(0)
    k_params, k_state, k_action = jax.random.split(key, 3)

    params = init_params(k_params)

    # Small-shape check (single grid step, batch padded 64 -> 128).
    B = 64
    state = jax.random.normal(k_state, (B, STATE_DIM), jnp.float32)
    action = jax.random.normal(k_action, (B, ACTION_DIM), jnp.float32)

    out = jax.block_until_ready(
        reward_network_forward(state, action, params, block_b=128))
    ref = reference_forward(state, action, params)
    assert out.shape == (B, 1), out.shape
    # Tolerance reflects bf16 matmuls (f32 accumulation) vs the f32 reference.
    assert jnp.allclose(out, ref, atol=3e-2, rtol=3e-2), (out, ref)

    # Multi-step grid + ragged batch check (300 rows, TB=128 -> 3 grid steps).
    B2 = 300
    k_s2, k_a2 = jax.random.split(jax.random.PRNGKey(1))
    state2 = jax.random.normal(k_s2, (B2, STATE_DIM), jnp.float32)
    action2 = jax.random.normal(k_a2, (B2, ACTION_DIM), jnp.float32)
    out2 = jax.block_until_ready(
        reward_network_forward(state2, action2, params, block_b=128))
    ref2 = reference_forward(state2, action2, params)
    assert out2.shape == (B2, 1), out2.shape
    assert jnp.allclose(out2, ref2, atol=3e-2, rtol=3e-2), (out2, ref2)

    print("KERNEL_OK")
</pallas_src>

<mosaic_0001>
module attributes {stable_mosaic.version = 11 : i64} {
  func.func @reward_mlp_kernel(%arg0: i32, %arg1: memref<8x128xbf16, #tpu.memory_space<vmem>>, %arg2: memref<256x8xbf16, #tpu.memory_space<vmem>>, %arg3: memref<256x256xbf16, #tpu.memory_space<vmem>>, %arg4: memref<256x1xf32, #tpu.memory_space<vmem>>, %arg5: memref<8x256xbf16, #tpu.memory_space<vmem>>, %arg6: memref<1x1xf32, #tpu.memory_space<smem>>, %arg7: memref<1x128xf32, #tpu.memory_space<vmem>>) attributes {dimension_semantics = [#tpu.dimension_semantics<parallel>], iteration_bounds = array<i64: 1>, scalar_prefetch = 0 : i64, scratch_operands = 0 : i64, tpu.core_type = #tpu.core_type<tc>, window_params = [{transform_indices = @transform_0, window_bounds = array<i64: 8, 128>}, {pipeline_mode = #tpu.pipeline_mode<synchronous>, transform_indices = @transform_1, window_bounds = array<i64: 256, 8>}, {pipeline_mode = #tpu.pipeline_mode<synchronous>, transform_indices = @transform_2, window_bounds = array<i64: 256, 256>}, {pipeline_mode = #tpu.pipeline_mode<synchronous>, transform_indices = @transform_3, window_bounds = array<i64: 256, 1>}, {pipeline_mode = #tpu.pipeline_mode<synchronous>, transform_indices = @transform_4, window_bounds = array<i64: 8, 256>}, {transform_indices = @transform_5, window_bounds = array<i64: 1, 1>}, {transform_indices = @transform_6, window_bounds = array<i64: 1, 128>}]} {
    %c0 = arith.constant 0 : index
    %c0_0 = arith.constant 0 : index
    %0 = vector.load %arg2[%c0, %c0_0] : memref<256x8xbf16, #tpu.memory_space<vmem>>, vector<256x8xbf16>
    %c0_1 = arith.constant 0 : index
    %c0_2 = arith.constant 0 : index
    %1 = vector.load %arg1[%c0_1, %c0_2] : memref<8x128xbf16, #tpu.memory_space<vmem>>, vector<8x128xbf16>
    %cst = arith.constant dense<0.000000e+00> : vector<256x128xf32>
    %2 = tpu.matmul %0, %1, %cst {dimension_numbers = #tpu.dot_dimension_numbers<[1], [0], [0], [1], [0, 0, 1, 1], [], []>} : vector<256x8xbf16>, vector<8x128xbf16>, vector<256x128xf32> -> vector<256x128xf32>
    %cst_3 = arith.constant 0.000000e+00 : f32
    %3 = vector.broadcast %cst_3 : f32 to vector<256x128xf32>
    %4 = arith.maximumf %2, %3 : vector<256x128xf32>
    %5 = arith.truncf %4 : vector<256x128xf32> to vector<256x128xbf16>
    %c0_4 = arith.constant 0 : index
    %c0_5 = arith.constant 0 : index
    %6 = vector.load %arg3[%c0_4, %c0_5] : memref<256x256xbf16, #tpu.memory_space<vmem>>, vector<256x256xbf16>
    %cst_6 = arith.constant dense<0.000000e+00> : vector<256x128xf32>
    %7 = tpu.matmul %6, %5, %cst_6 {dimension_numbers = #tpu.dot_dimension_numbers<[1], [0], [0], [1], [0, 0, 1, 1], [], []>} : vector<256x256xbf16>, vector<256x128xbf16>, vector<256x128xf32> -> vector<256x128xf32>
    %c0_7 = arith.constant 0 : index
    %c0_8 = arith.constant 0 : index
    %8 = vector.load %arg4[%c0_7, %c0_8] : memref<256x1xf32, #tpu.memory_space<vmem>>, vector<256x1xf32>
    %9 = vector.broadcast %8 : vector<256x1xf32> to vector<256x128xf32>
    %10 = arith.addf %7, %9 : vector<256x128xf32>
    %cst_9 = arith.constant 0.000000e+00 : f32
    %11 = vector.broadcast %cst_9 : f32 to vector<256x128xf32>
    %12 = arith.maximumf %10, %11 : vector<256x128xf32>
    %13 = arith.truncf %12 : vector<256x128xf32> to vector<256x128xbf16>
    %c0_10 = arith.constant 0 : index
    %c0_11 = arith.constant 0 : index
    %14 = vector.load %arg5[%c0_10, %c0_11] : memref<8x256xbf16, #tpu.memory_space<vmem>>, vector<8x256xbf16>
    %cst_12 = arith.constant dense<0.000000e+00> : vector<8x128xf32>
    %15 = tpu.matmul %14, %13, %cst_12 {dimension_numbers = #tpu.dot_dimension_numbers<[1], [0], [0], [1], [0, 0, 1, 1], [], []>} : vector<8x256xbf16>, vector<256x128xbf16>, vector<8x128xf32> -> vector<8x128xf32>
    %16 = vector.extract_strided_slice %15 {offsets = [0, 0], sizes = [1, 128], strides = [1, 1]} : vector<8x128xf32> to vector<1x128xf32>
    %c0_13 = arith.constant 0 : index
    %c0_14 = arith.constant 0 : index
    %17 = memref.load %arg6[%c0_13, %c0_14] : memref<1x1xf32, #tpu.memory_space<smem>>
    %18 = vector.broadcast %17 : f32 to vector<1x128xf32>
    %19 = arith.addf %16, %18 : vector<1x128xf32>
    %c0_15 = arith.constant 0 : index
    %c0_16 = arith.constant 0 : index
    %20 = vector.load %arg7[%c0_15, %c0_16] : memref<1x128xf32, #tpu.memory_space<vmem>>, vector<1x128xf32>
    tpu.vector_store %arg7[%c0_15, %c0_16], %19 {strides = array<i32>} : memref<1x128xf32, #tpu.memory_space<vmem>>, vector<1x128xf32>,
    return
  }
  func.func @transform_0(%arg0: i32) -> (i32, i32) {
    %c0_i32 = arith.constant 0 : i32
    %c0_i32_0 = arith.constant 0 : i32
    return %c0_i32, %arg0 : i32, i32
  }
  func.func @transform_1(%arg0: i32) -> (i32, i32) {
    %c0_i32 = arith.constant 0 : i32
    %c0_i32_0 = arith.constant 0 : i32
    %c0_i32_1 = arith.constant 0 : i32
    return %c0_i32, %c0_i32_0 : i32, i32
  }
  func.func @transform_2(%arg0: i32) -> (i32, i32) {
    %c0_i32 = arith.constant 0 : i32
    %c0_i32_0 = arith.constant 0 : i32
    %c0_i32_1 = arith.constant 0 : i32
    return %c0_i32, %c0_i32_0 : i32, i32
  }
  func.func @transform_3(%arg0: i32) -> (i32, i32) {
    %c0_i32 = arith.constant 0 : i32
    %c0_i32_0 = arith.constant 0 : i32
    %c0_i32_1 = arith.constant 0 : i32
    return %c0_i32, %c0_i32_0 : i32, i32
  }
  func.func @transform_4(%arg0: i32) -> (i32, i32) {
    %c0_i32 = arith.constant 0 : i32
    %c0_i32_0 = arith.constant 0 : i32
    %c0_i32_1 = arith.constant 0 : i32
    return %c0_i32, %c0_i32_0 : i32, i32
  }
  func.func @transform_5(%arg0: i32) -> (i32, i32) {
    %c0_i32 = arith.constant 0 : i32
    %c0_i32_0 = arith.constant 0 : i32
    %c0_i32_1 = arith.constant 0 : i32
    return %c0_i32, %c0_i32_0 : i32, i32
  }
  func.func @transform_6(%arg0: i32) -> (i32, i32) {
    %c0_i32 = arith.constant 0 : i32
    %c0_i32_0 = arith.constant 0 : i32
    return %c0_i32, %arg0 : i32, i32
  }
}

</mosaic_0001>

<llo_original>
// kernel: tpu_custom_call.1
$region0: #{tpu_custom_call.1}
  #allocation0 [shape = 'u32[]', space=smem, size = 0x4, offset = 0x4, fixed_abs, tag = 'smem constant byte address 0x4 - core index']
  #allocation1 [shape = 'u32[72,128]{1,0:T(1,128)}', space=vmem, size = 0x9000, scoped, tag = 'internal scratch']
  #allocation2 [shape = 'f32[1,1]{1,0:T(1,128)S(6)}', space=smem, size = 0x200, scoped, tag = 'scoped memory for tpu_custom_call.1']
  %s0 = inlined_call_operand.vmem [shape: bf16[8,128], index: 0, kind: input, shape index: {}]
  %s1 = inlined_call_operand.vmem [shape: bf16[256,8], index: 1, kind: input, shape index: {}]
  %s2 = inlined_call_operand.vmem [shape: bf16[256,256], index: 2, kind: input, shape index: {}]
  %s3 = inlined_call_operand.vmem [shape: f32[256,1], index: 3, kind: input, shape index: {}]
  %s4 = inlined_call_operand.vmem [shape: bf16[8,256], index: 4, kind: input, shape index: {}]
  %s5 = inlined_call_operand.<no memory space> [shape: f32[1,1], index: 5, kind: input, shape index: {}]
  %s6 = inlined_call_operand.hbm [shape: f32[1,128], index: 6, kind: output, shape index: {}]
  %s7 = sld [smem:[#allocation0]]
  $region34: #{tpu_custom_call.1} parent=0
    _
  %s9 = ssub.s32 1, %s7
  %s10 = scalar_select 0, %s9, %s7
  %11 = sst [smem:[#allocation2]] %s5
  $region1: #{tpu_custom_call.1} parent=0
    #allocation3 [shape = 'u8[512]{0}', space=vmem, size = 0x400, scoped, tag = 'output window, operand 0, single buffered']
    #allocation4 [shape = 's32[1]{0}', space=sflag, size = 0x4, scoped, tag = 'scoped memory for tpu_custom_call.1']
    %12 = vsyncpa [#allocation4], 0
    // Predicated region
    $region2: #{tpu_custom_call.1} parent=1 // pred_check
      _
    $region3: #{tpu_custom_call.1} parent=1 // pred_check_branch
      %14 = sbr.rel (0) target = $region5
    $region4: #{tpu_custom_call.1} parent=1 // pred_region
      _
    $region5: #{tpu_custom_call.1} parent=1 // pred_fallthru
      _
    // Predicated region
    $region6: #{tpu_custom_call.1} parent=1 // pred_check
      _
    $region7: #{tpu_custom_call.1} parent=1 // pred_check_branch
      %16 = sbr.rel (0) target = $region9
    $region8: #{tpu_custom_call.1} parent=1 // pred_region
      _
    $region9: #{tpu_custom_call.1} parent=1 // pred_fallthru
      _
    // Predicated region
    $region10: #{tpu_custom_call.1} parent=1 // pred_check
      _
    $region11: #{tpu_custom_call.1} parent=1 // pred_check_branch
      %18 = sbr.rel (0) target = $region13
    $region12: #{tpu_custom_call.1} parent=1 // pred_region
      _
    $region13: #{tpu_custom_call.1} parent=1 // pred_fallthru
      _
    // Predicated region
    $region14: #{tpu_custom_call.1} parent=1 // pred_check
      _
    $region15: #{tpu_custom_call.1} parent=1 // pred_check_branch
      %20 = sbr.rel (0) target = $region17
    $region16: #{tpu_custom_call.1} parent=1 // pred_region
      _
    $region17: #{tpu_custom_call.1} parent=1 // pred_fallthru
      _
    // Predicated region
    $region18: #{tpu_custom_call.1} parent=1 // pred_check
      _
    $region19: #{tpu_custom_call.1} parent=1 // pred_check_branch
      %22 = sbr.rel (0) target = $region21
    $region20: #{tpu_custom_call.1} parent=1 // pred_region
      _
    $region21: #{tpu_custom_call.1} parent=1 // pred_fallthru
      _
    // Predicated region
    $region22: #{tpu_custom_call.1} parent=1 // pred_check
      _
    $region23: #{tpu_custom_call.1} parent=1 // pred_check_branch
      %24 = sbr.rel (0) target = $region25
    $region24: #{tpu_custom_call.1} parent=1 // pred_region
      _
    $region25: #{tpu_custom_call.1} parent=1 // pred_fallthru
      _
    %v26 = vld [vmem:[%s1] sm:$0xf]
    %v27 = vld [vmem:[%s1 + $0x4] sm:$0xf]
    %v28 = vld [vmem:[%s1 + $0x8] sm:$0xf]
    %v29 = vld [vmem:[%s1 + $0xc] sm:$0xf]
    %v30 = vld [vmem:[%s1 + $0x10] sm:$0xf]
    %v31 = vld [vmem:[%s1 + $0x14] sm:$0xf]
    %v32 = vld [vmem:[%s1 + $0x18] sm:$0xf]
    %v33 = vld [vmem:[%s1 + $0x1c] sm:$0xf]
    %v34 = vld [vmem:[%s1 + $0x20] sm:$0xf]
    %v35 = vld [vmem:[%s1 + $0x24] sm:$0xf]
    %v36 = vld [vmem:[%s1 + $0x28] sm:$0xf]
    %v37 = vld [vmem:[%s1 + $0x2c] sm:$0xf]
    %v38 = vld [vmem:[%s1 + $0x30] sm:$0xf]
    %v39 = vld [vmem:[%s1 + $0x34] sm:$0xf]
    %v40 = vld [vmem:[%s1 + $0x38] sm:$0xf]
    %v41 = vld [vmem:[%s1 + $0x3c] sm:$0xf]
    %v42 = vld [vmem:[%s1 + $0x40] sm:$0xf]
    %v43 = vld [vmem:[%s1 + $0x44] sm:$0xf]
    %v44 = vld [vmem:[%s1 + $0x48] sm:$0xf]
    %v45 = vld [vmem:[%s1 + $0x4c] sm:$0xf]
    %v46 = vld [vmem:[%s1 + $0x50] sm:$0xf]
    %v47 = vld [vmem:[%s1 + $0x54] sm:$0xf]
    %v48 = vld [vmem:[%s1 + $0x58] sm:$0xf]
    %v49 = vld [vmem:[%s1 + $0x5c] sm:$0xf]
    %v50 = vld [vmem:[%s1 + $0x60] sm:$0xf]
    %v51 = vld [vmem:[%s1 + $0x64] sm:$0xf]
    %v52 = vld [vmem:[%s1 + $0x68] sm:$0xf]
    %v53 = vld [vmem:[%s1 + $0x6c] sm:$0xf]
    %v54 = vld [vmem:[%s1 + $0x70] sm:$0xf]
    %v55 = vld [vmem:[%s1 + $0x74] sm:$0xf]
    %v56 = vld [vmem:[%s1 + $0x78] sm:$0xf]
    %v57 = vld [vmem:[%s1 + $0x7c] sm:$0xf]
    %v58 = vld [vmem:[%s0] sm:$0xf]
    %v91 = vunpack.c.l.b16 %v26
    %v92 = vunpack.c.l.b16 %v27
    %v93 = vunpack.c.l.b16 %v28
    %v94 = vunpack.c.l.b16 %v29
    %v95 = vunpack.c.l.b16 %v30
    %v96 = vunpack.c.l.b16 %v31
    %v97 = vunpack.c.l.b16 %v32
    %v98 = vunpack.c.l.b16 %v33
    %v99 = vunpack.c.l.b16 %v34
    %v100 = vunpack.c.l.b16 %v35
    %v101 = vunpack.c.l.b16 %v36
    %v102 = vunpack.c.l.b16 %v37
    %v103 = vunpack.c.l.b16 %v38
    %v104 = vunpack.c.l.b16 %v39
    %v105 = vunpack.c.l.b16 %v40
    %v106 = vunpack.c.l.b16 %v41
    %v107 = vunpack.c.l.b16 %v42
    %v108 = vunpack.c.l.b16 %v43
    %v109 = vunpack.c.l.b16 %v44
    %v110 = vunpack.c.l.b16 %v45
    %v111 = vunpack.c.l.b16 %v46
    %v112 = vunpack.c.l.b16 %v47
    %v113 = vunpack.c.l.b16 %v48
    %v114 = vunpack.c.l.b16 %v49
    %v115 = vunpack.c.l.b16 %v50
    %v116 = vunpack.c.l.b16 %v51
    %v117 = vunpack.c.l.b16 %v52
    %v118 = vunpack.c.l.b16 %v53
    %v119 = vunpack.c.l.b16 %v54
    %v120 = vunpack.c.l.b16 %v55
    %v121 = vunpack.c.l.b16 %v56
    %v122 = vunpack.c.l.b16 %v57
    %v123 = vpack.c.b16 %v92, %v91
    %v124 = vpack.c.b16 %v94, %v93
    %v125 = vpack.c.b16 %v96, %v95
    %v126 = vpack.c.b16 %v98, %v97
    %v127 = vpack.c.b16 %v100, %v99
    %v128 = vpack.c.b16 %v102, %v101
    %v129 = vpack.c.b16 %v104, %v103
    %v130 = vpack.c.b16 %v106, %v105
    %v131 = vpack.c.b16 %v108, %v107
    %v132 = vpack.c.b16 %v110, %v109
    %v133 = vpack.c.b16 %v112, %v111
    %v134 = vpack.c.b16 %v114, %v113
    %v135 = vpack.c.b16 %v116, %v115
    %v136 = vpack.c.b16 %v118, %v117
    %v137 = vpack.c.b16 %v120, %v119
    %v138 = vpack.c.b16 %v122, %v121
    %vm139 = vcmask 64512
    %v141 = vsel %vm139, %v123, 0
    %v144 = vsel %vm139, %v124, 0
    %v147 = vsel %vm139, %v125, 0
    %v150 = vsel %vm139, %v126, 0
    %v153 = vsel %vm139, %v127, 0
    %v156 = vsel %vm139, %v128, 0
    %v159 = vsel %vm139, %v129, 0
    %v162 = vsel %vm139, %v130, 0
    %v165 = vsel %vm139, %v131, 0
    %v168 = vsel %vm139, %v132, 0
    %v171 = vsel %vm139, %v133, 0
    %v174 = vsel %vm139, %v134, 0
    %v177 = vsel %vm139, %v135, 0
    %v180 = vsel %vm139, %v136, 0
    %v183 = vsel %vm139, %v137, 0
    %v186 = vsel %vm139, %v138, 0
    %vm188 = vcmask 1043456
    %v190 = vsel %vm188, %v58, 0
    %192 = vmatpush.bf16.msra.mxu0 0
    %193 = vmatpush.bf16.msra.mxu0 0
    %194 = vmatpush.bf16.msra.mxu0 0
    %195 = vmatpush.bf16.msra.mxu0 0
    %196 = vmatpush.bf16.msra.mxu0 0
    %197 = vmatpush.bf16.msra.mxu0 0
    %198 = vmatpush.bf16.msra.mxu0 0
    %199 = vmatpush.bf16.msra.mxu0 %v190
    %200 = vmatmul.bf16.gmra.mxu0 %v141
    %v201 = vpop.f32.mrf.mxu0
    %v202 = vadd.f32 0.0, %v201
    %v203 = vpop.f32.mrf.mxu0
    %v204 = vadd.f32 0.0, %v203
    %205 = vmatmul.bf16.gmra.mxu0 %v144
    %v206 = vpop.f32.mrf.mxu0
    %v207 = vadd.f32 0.0, %v206
    %v208 = vpop.f32.mrf.mxu0
    %v209 = vadd.f32 0.0, %v208
    %210 = vmatmul.bf16.gmra.mxu0 %v147
    %v211 = vpop.f32.mrf.mxu0
    %v212 = vadd.f32 0.0, %v211
    %v213 = vpop.f32.mrf.mxu0
    %v214 = vadd.f32 0.0, %v213
    %215 = vmatmul.bf16.gmra.mxu0 %v150
    %v216 = vpop.f32.mrf.mxu0
    %v217 = vadd.f32 0.0, %v216
    %v218 = vpop.f32.mrf.mxu0
    %v219 = vadd.f32 0.0, %v218
    %220 = vmatmul.bf16.gmra.mxu0 %v153
    %v221 = vpop.f32.mrf.mxu0
    %v222 = vadd.f32 0.0, %v221
    %v223 = vpop.f32.mrf.mxu0
    %v224 = vadd.f32 0.0, %v223
    %225 = vmatmul.bf16.gmra.mxu0 %v156
    %v226 = vpop.f32.mrf.mxu0
    %v227 = vadd.f32 0.0, %v226
    %v228 = vpop.f32.mrf.mxu0
    %v229 = vadd.f32 0.0, %v228
    %230 = vmatmul.bf16.gmra.mxu0 %v159
    %v231 = vpop.f32.mrf.mxu0
    %v232 = vadd.f32 0.0, %v231
    %v233 = vpop.f32.mrf.mxu0
    %v234 = vadd.f32 0.0, %v233
    %235 = vmatmul.bf16.gmra.mxu0 %v162
    %v236 = vpop.f32.mrf.mxu0
    %v237 = vadd.f32 0.0, %v236
    %v238 = vpop.f32.mrf.mxu0
    %v239 = vadd.f32 0.0, %v238
    %240 = vmatmul.bf16.gmra.mxu0 %v165
    %v241 = vpop.f32.mrf.mxu0
    %v242 = vadd.f32 0.0, %v241
    %v243 = vpop.f32.mrf.mxu0
    %v244 = vadd.f32 0.0, %v243
    %245 = vmatmul.bf16.gmra.mxu0 %v168
    %v246 = vpop.f32.mrf.mxu0
    %v247 = vadd.f32 0.0, %v246
    %v248 = vpop.f32.mrf.mxu0
    %v249 = vadd.f32 0.0, %v248
    %250 = vmatmul.bf16.gmra.mxu0 %v171
    %v251 = vpop.f32.mrf.mxu0
    %v252 = vadd.f32 0.0, %v251
    %v253 = vpop.f32.mrf.mxu0
    %v254 = vadd.f32 0.0, %v253
    %255 = vmatmul.bf16.gmra.mxu0 %v174
    %v256 = vpop.f32.mrf.mxu0
    %v257 = vadd.f32 0.0, %v256
    %v258 = vpop.f32.mrf.mxu0
    %v259 = vadd.f32 0.0, %v258
    %260 = vmatmul.bf16.gmra.mxu0 %v177
    %v261 = vpop.f32.mrf.mxu0
    %v262 = vadd.f32 0.0, %v261
    %v263 = vpop.f32.mrf.mxu0
    %v264 = vadd.f32 0.0, %v263
    %265 = vmatmul.bf16.gmra.mxu0 %v180
    %v266 = vpop.f32.mrf.mxu0
    %v267 = vadd.f32 0.0, %v266
    %v268 = vpop.f32.mrf.mxu0
    %v269 = vadd.f32 0.0, %v268
    %270 = vmatmul.bf16.gmra.mxu0 %v183
    %v271 = vpop.f32.mrf.mxu0
    %v272 = vadd.f32 0.0, %v271
    %v273 = vpop.f32.mrf.mxu0
    %v274 = vadd.f32 0.0, %v273
    %275 = vmatmul.bf16.gmra.mxu0 %v186
    %v276 = vpop.f32.mrf.mxu0
    %v277 = vadd.f32 0.0, %v276
    %v278 = vpop.f32.mrf.mxu0
    %v279 = vadd.f32 0.0, %v278
    %280 = vdwg.mxu0
    %v281 = vmax.f32 %v202, 0.0
    %v282 = vmax.f32 %v204, 0.0
    %v283 = vmax.f32 %v207, 0.0
    %v284 = vmax.f32 %v209, 0.0
    %v285 = vmax.f32 %v212, 0.0
    %v286 = vmax.f32 %v214, 0.0
    %v287 = vmax.f32 %v217, 0.0
    %v288 = vmax.f32 %v219, 0.0
    %v289 = vmax.f32 %v222, 0.0
    %v290 = vmax.f32 %v224, 0.0
    %v291 = vmax.f32 %v227, 0.0
    %v292 = vmax.f32 %v229, 0.0
    %v293 = vmax.f32 %v232, 0.0
    %v294 = vmax.f32 %v234, 0.0
    %v295 = vmax.f32 %v237, 0.0
    %v296 = vmax.f32 %v239, 0.0
    %v297 = vmax.f32 %v242, 0.0
    %v298 = vmax.f32 %v244, 0.0
    %v299 = vmax.f32 %v247, 0.0
    %v300 = vmax.f32 %v249, 0.0
    %v301 = vmax.f32 %v252, 0.0
    %v302 = vmax.f32 %v254, 0.0
    %v303 = vmax.f32 %v257, 0.0
    %v304 = vmax.f32 %v259, 0.0
    %v305 = vmax.f32 %v262, 0.0
    %v306 = vmax.f32 %v264, 0.0
    %v307 = vmax.f32 %v267, 0.0
    %v308 = vmax.f32 %v269, 0.0
    %v309 = vmax.f32 %v272, 0.0
    %v310 = vmax.f32 %v274, 0.0
    %v311 = vmax.f32 %v277, 0.0
    %v312 = vmax.f32 %v279, 0.0
    %v313 = vpack.c.bf16 %v282, %v281
    %v314 = vpack.c.bf16 %v284, %v283
    %v315 = vpack.c.bf16 %v286, %v285
    %v316 = vpack.c.bf16 %v288, %v287
    %v317 = vpack.c.bf16 %v290, %v289
    %v318 = vpack.c.bf16 %v292, %v291
    %v319 = vpack.c.bf16 %v294, %v293
    %v320 = vpack.c.bf16 %v296, %v295
    %v321 = vpack.c.bf16 %v298, %v297
    %v322 = vpack.c.bf16 %v300, %v299
    %v323 = vpack.c.bf16 %v302, %v301
    %v324 = vpack.c.bf16 %v304, %v303
    %v325 = vpack.c.bf16 %v306, %v305
    %v326 = vpack.c.bf16 %v308, %v307
    %v327 = vpack.c.bf16 %v310, %v309
    %v328 = vpack.c.bf16 %v312, %v311
    %v329 = vld [vmem:[%s2] sm:$0xff]
    %v330 = vld [vmem:[%s2 + $0x8] sm:$0xff]
    %v331 = vld [vmem:[%s2 + $0x10] sm:$0xff]
    %v332 = vld [vmem:[%s2 + $0x18] sm:$0xff]
    %v333 = vld [vmem:[%s2 + $0x20] sm:$0xff]
    %v334 = vld [vmem:[%s2 + $0x28] sm:$0xff]
    %v335 = vld [vmem:[%s2 + $0x30] sm:$0xff]
    %v336 = vld [vmem:[%s2 + $0x38] sm:$0xff]
    %v337 = vld [vmem:[%s2 + $0x40] sm:$0xff]
    %v338 = vld [vmem:[%s2 + $0x48] sm:$0xff]
    %v339 = vld [vmem:[%s2 + $0x50] sm:$0xff]
    %v340 = vld [vmem:[%s2 + $0x58] sm:$0xff]
    %v341 = vld [vmem:[%s2 + $0x60] sm:$0xff]
    %v342 = vld [vmem:[%s2 + $0x68] sm:$0xff]
    %v343 = vld [vmem:[%s2 + $0x70] sm:$0xff]
    %v344 = vld [vmem:[%s2 + $0x78] sm:$0xff]
    %v345 = vld [vmem:[%s2 + $0x80] sm:$0xff]
    %v346 = vld [vmem:[%s2 + $0x88] sm:$0xff]
    %v347 = vld [vmem:[%s2 + $0x90] sm:$0xff]
    %v348 = vld [vmem:[%s2 + $0x98] sm:$0xff]
    %v349 = vld [vmem:[%s2 + $0xa0] sm:$0xff]
    %v350 = vld [vmem:[%s2 + $0xa8] sm:$0xff]
    %v351 = vld [vmem:[%s2 + $0xb0] sm:$0xff]
    %v352 = vld [vmem:[%s2 + $0xb8] sm:$0xff]
    %v353 = vld [vmem:[%s2 + $0xc0] sm:$0xff]
    %v354 = vld [vmem:[%s2 + $0xc8] sm:$0xff]
    %v355 = vld [vmem:[%s2 + $0xd0] sm:$0xff]
    %v356 = vld [vmem:[%s2 + $0xd8] sm:$0xff]
    %v357 = vld [vmem:[%s2 + $0xe0] sm:$0xff]
    %v358 = vld [vmem:[%s2 + $0xe8] sm:$0xff]
    %v359 = vld [vmem:[%s2 + $0xf0] sm:$0xff]
    %v360 = vld [vmem:[%s2 + $0xf8] sm:$0xff]
    %v361 = vld [vmem:[%s3] sm:$0xff]
    %v362 = vld [vmem:[%s3 + $0x8] sm:$0xff]
    %v363 = vld [vmem:[%s3 + $0x10] sm:$0xff]
    %v364 = vld [vmem:[%s3 + $0x18] sm:$0xff]
    %v365 = vld [vmem:[%s3 + $0x20] sm:$0xff]
    %v366 = vld [vmem:[%s3 + $0x28] sm:$0xff]
    %v367 = vld [vmem:[%s3 + $0x30] sm:$0xff]
    %v368 = vld [vmem:[%s3 + $0x38] sm:$0xff]
    %v369 = vld [vmem:[%s3 + $0x40] sm:$0xff]
    %v370 = vld [vmem:[%s3 + $0x48] sm:$0xff]
    %v371 = vld [vmem:[%s3 + $0x50] sm:$0xff]
    %v372 = vld [vmem:[%s3 + $0x58] sm:$0xff]
    %v373 = vld [vmem:[%s3 + $0x60] sm:$0xff]
    %v374 = vld [vmem:[%s3 + $0x68] sm:$0xff]
    %v375 = vld [vmem:[%s3 + $0x70] sm:$0xff]
    %v376 = vld [vmem:[%s3 + $0x78] sm:$0xff]
    %v377 = vld [vmem:[%s3 + $0x80] sm:$0xff]
    %v378 = vld [vmem:[%s3 + $0x88] sm:$0xff]
    %v379 = vld [vmem:[%s3 + $0x90] sm:$0xff]
    %v380 = vld [vmem:[%s3 + $0x98] sm:$0xff]
    %v381 = vld [vmem:[%s3 + $0xa0] sm:$0xff]
    %v382 = vld [vmem:[%s3 + $0xa8] sm:$0xff]
    %v383 = vld [vmem:[%s3 + $0xb0] sm:$0xff]
    %v384 = vld [vmem:[%s3 + $0xb8] sm:$0xff]
    %v385 = vld [vmem:[%s3 + $0xc0] sm:$0xff]
    %v386 = vld [vmem:[%s3 + $0xc8] sm:$0xff]
    %v387 = vld [vmem:[%s3 + $0xd0] sm:$0xff]
    %v388 = vld [vmem:[%s3 + $0xd8] sm:$0xff]
    %v389 = vld [vmem:[%s3 + $0xe0] sm:$0xff]
    %v390 = vld [vmem:[%s3 + $0xe8] sm:$0xff]
    %v391 = vld [vmem:[%s3 + $0xf0] sm:$0xff]
    %v392 = vld [vmem:[%s3 + $0xf8] sm:$0xff]
    %394 = vset.pattern.permute.xlu0 0
    %395 = vperm.xlu0 %394, %v361
    %v396 = vpop.permute.xlu0 %395
    %399 = vset.pattern.permute.xlu0 0
    %400 = vperm.xlu0 %399, %v362
    %v401 = vpop.permute.xlu0 %400
    %404 = vset.pattern.permute.xlu0 0
    %405 = vperm.xlu0 %404, %v363
    %v406 = vpop.permute.xlu0 %405
    %409 = vset.pattern.permute.xlu0 0
    %410 = vperm.xlu0 %409, %v364
    %v411 = vpop.permute.xlu0 %410
    %414 = vset.pattern.permute.xlu0 0
    %415 = vperm.xlu0 %414, %v365
    %v416 = vpop.permute.xlu0 %415
    %419 = vset.pattern.permute.xlu0 0
    %420 = vperm.xlu0 %419, %v366
    %v421 = vpop.permute.xlu0 %420
    %424 = vset.pattern.permute.xlu0 0
    %425 = vperm.xlu0 %424, %v367
    %v426 = vpop.permute.xlu0 %425
    %429 = vset.pattern.permute.xlu0 0
    %430 = vperm.xlu0 %429, %v368
    %v431 = vpop.permute.xlu0 %430
    %434 = vset.pattern.permute.xlu0 0
    %435 = vperm.xlu0 %434, %v369
    %v436 = vpop.permute.xlu0 %435
    %439 = vset.pattern.permute.xlu0 0
    %440 = vperm.xlu0 %439, %v370
    %v441 = vpop.permute.xlu0 %440
    %444 = vset.pattern.permute.xlu0 0
    %445 = vperm.xlu0 %444, %v371
    %v446 = vpop.permute.xlu0 %445
    %449 = vset.pattern.permute.xlu0 0
    %450 = vperm.xlu0 %449, %v372
    %v451 = vpop.permute.xlu0 %450
    %454 = vset.pattern.permute.xlu0 0
    %455 = vperm.xlu0 %454, %v373
    %v456 = vpop.permute.xlu0 %455
    %459 = vset.pattern.permute.xlu0 0
    %460 = vperm.xlu0 %459, %v374
    %v461 = vpop.permute.xlu0 %460
    %464 = vset.pattern.permute.xlu0 0
    %465 = vperm.xlu0 %464, %v375
    %v466 = vpop.permute.xlu0 %465
    %469 = vset.pattern.permute.xlu0 0
    %470 = vperm.xlu0 %469, %v376
    %v471 = vpop.permute.xlu0 %470
    %474 = vset.pattern.permute.xlu0 0
    %475 = vperm.xlu0 %474, %v377
    %v476 = vpop.permute.xlu0 %475
    %479 = vset.pattern.permute.xlu0 0
    %480 = vperm.xlu0 %479, %v378
    %v481 = vpop.permute.xlu0 %480
    %484 = vset.pattern.permute.xlu0 0
    %485 = vperm.xlu0 %484, %v379
    %v486 = vpop.permute.xlu0 %485
    %489 = vset.pattern.permute.xlu0 0
    %490 = vperm.xlu0 %489, %v380
    %v491 = vpop.permute.xlu0 %490
    %494 = vset.pattern.permute.xlu0 0
    %495 = vperm.xlu0 %494, %v381
    %v496 = vpop.permute.xlu0 %495
    %499 = vset.pattern.permute.xlu0 0
    %500 = vperm.xlu0 %499, %v382
    %v501 = vpop.permute.xlu0 %500
    %504 = vset.pattern.permute.xlu0 0
    %505 = vperm.xlu0 %504, %v383
    %v506 = vpop.permute.xlu0 %505
    %509 = vset.pattern.permute.xlu0 0
    %510 = vperm.xlu0 %509, %v384
    %v511 = vpop.permute.xlu0 %510
    %514 = vset.pattern.permute.xlu0 0
    %515 = vperm.xlu0 %514, %v385
    %v516 = vpop.permute.xlu0 %515
    %519 = vset.pattern.permute.xlu0 0
    %520 = vperm.xlu0 %519, %v386
    %v521 = vpop.permute.xlu0 %520
    %524 = vset.pattern.permute.xlu0 0
    %525 = vperm.xlu0 %524, %v387
    %v526 = vpop.permute.xlu0 %525
    %529 = vset.pattern.permute.xlu0 0
    %530 = vperm.xlu0 %529, %v388
    %v531 = vpop.permute.xlu0 %530
    %534 = vset.pattern.permute.xlu0 0
    %535 = vperm.xlu0 %534, %v389
    %v536 = vpop.permute.xlu0 %535
    %539 = vset.pattern.permute.xlu0 0
    %540 = vperm.xlu0 %539, %v390
    %v541 = vpop.permute.xlu0 %540
    %544 = vset.pattern.permute.xlu0 0
    %545 = vperm.xlu0 %544, %v391
    %v546 = vpop.permute.xlu0 %545
    %549 = vset.pattern.permute.xlu0 0
    %550 = vperm.xlu0 %549, %v392
    %v551 = vpop.permute.xlu0 %550
    %v585 = vunpack.c.l.b16 %v329
    %v586 = vunpack.c.h.b16 %v329
    %v587 = vunpack.c.l.b16 %v330
    %v588 = vunpack.c.h.b16 %v330
    %v589 = vunpack.c.l.b16 %v331
    %v590 = vunpack.c.h.b16 %v331
    %v591 = vunpack.c.l.b16 %v332
    %v592 = vunpack.c.h.b16 %v332
    %v593 = vunpack.c.l.b16 %v333
    %v594 = vunpack.c.h.b16 %v333
    %v595 = vunpack.c.l.b16 %v334
    %v596 = vunpack.c.h.b16 %v334
    %v597 = vunpack.c.l.b16 %v335
    %v598 = vunpack.c.h.b16 %v335
    %v599 = vunpack.c.l.b16 %v336
    %v600 = vunpack.c.h.b16 %v336
    %v601 = vunpack.c.l.b16 %v337
    %v602 = vunpack.c.h.b16 %v337
    %v603 = vunpack.c.l.b16 %v338
    %v604 = vunpack.c.h.b16 %v338
    %v605 = vunpack.c.l.b16 %v339
    %v606 = vunpack.c.h.b16 %v339
    %v607 = vunpack.c.l.b16 %v340
    %v608 = vunpack.c.h.b16 %v340
    %v609 = vunpack.c.l.b16 %v341
    %v610 = vunpack.c.h.b16 %v341
    %v611 = vunpack.c.l.b16 %v342
    %v612 = vunpack.c.h.b16 %v342
    %v613 = vunpack.c.l.b16 %v343
    %v614 = vunpack.c.h.b16 %v343
    %v615 = vunpack.c.l.b16 %v344
    %v616 = vunpack.c.h.b16 %v344
    %v617 = vunpack.c.l.b16 %v345
    %v618 = vunpack.c.h.b16 %v345
    %v619 = vunpack.c.l.b16 %v346
    %v620 = vunpack.c.h.b16 %v346
    %v621 = vunpack.c.l.b16 %v347
    %v622 = vunpack.c.h.b16 %v347
    %v623 = vunpack.c.l.b16 %v348
    %v624 = vunpack.c.h.b16 %v348
    %v625 = vunpack.c.l.b16 %v349
    %v626 = vunpack.c.h.b16 %v349
    %v627 = vunpack.c.l.b16 %v350
    %v628 = vunpack.c.h.b16 %v350
    %v629 = vunpack.c.l.b16 %v351
    %v630 = vunpack.c.h.b16 %v351
    %v631 = vunpack.c.l.b16 %v352
    %v632 = vunpack.c.h.b16 %v352
    %v633 = vunpack.c.l.b16 %v353
    %v634 = vunpack.c.h.b16 %v353
    %v635 = vunpack.c.l.b16 %v354
    %v636 = vunpack.c.h.b16 %v354
    %v637 = vunpack.c.l.b16 %v355
    %v638 = vunpack.c.h.b16 %v355
    %v639 = vunpack.c.l.b16 %v356
    %v640 = vunpack.c.h.b16 %v356
    %v641 = vunpack.c.l.b16 %v357
    %v642 = vunpack.c.h.b16 %v357
    %v643 = vunpack.c.l.b16 %v358
    %v644 = vunpack.c.h.b16 %v358
    %v645 = vunpack.c.l.b16 %v359
    %v646 = vunpack.c.h.b16 %v359
    %v647 = vunpack.c.l.b16 %v360
    %v648 = vunpack.c.h.b16 %v360
    %v649 = vpack.c.b16 %v587, %v585
    %v650 = vpack.c.b16 %v588, %v586
    %v651 = vpack.c.b16 %v591, %v589
    %v652 = vpack.c.b16 %v592, %v590
    %v653 = vpack.c.b16 %v595, %v593
    %v654 = vpack.c.b16 %v596, %v594
    %v655 = vpack.c.b16 %v599, %v597
    %v656 = vpack.c.b16 %v600, %v598
    %v657 = vpack.c.b16 %v603, %v601
    %v658 = vpack.c.b16 %v604, %v602
    %v659 = vpack.c.b16 %v607, %v605
    %v660 = vpack.c.b16 %v608, %v606
    %v661 = vpack.c.b16 %v611, %v609
    %v662 = vpack.c.b16 %v612, %v610
    %v663 = vpack.c.b16 %v615, %v613
    %v664 = vpack.c.b16 %v616, %v614
    %v665 = vpack.c.b16 %v619, %v617
    %v666 = vpack.c.b16 %v620, %v618
    %v667 = vpack.c.b16 %v623, %v621
    %v668 = vpack.c.b16 %v624, %v622
    %v669 = vpack.c.b16 %v627, %v625
    %v670 = vpack.c.b16 %v628, %v626
    %v671 = vpack.c.b16 %v631, %v629
    %v672 = vpack.c.b16 %v632, %v630
    %v673 = vpack.c.b16 %v635, %v633
    %v674 = vpack.c.b16 %v636, %v634
    %v675 = vpack.c.b16 %v639, %v637
    %v676 = vpack.c.b16 %v640, %v638
    %v677 = vpack.c.b16 %v643, %v641
    %v678 = vpack.c.b16 %v644, %v642
    %v679 = vpack.c.b16 %v647, %v645
    %v680 = vpack.c.b16 %v648, %v646
    %713 = vmatpush.bf16.msra.mxu0 %v320
    %714 = vmatpush.bf16.msra.mxu0 %v319
    %715 = vmatpush.bf16.msra.mxu0 %v318
    %716 = vmatpush.bf16.msra.mxu0 %v317
    %717 = vmatpush.bf16.msra.mxu0 %v316
    %718 = vmatpush.bf16.msra.mxu0 %v315
    %719 = vmatpush.bf16.msra.mxu0 %v314
    %720 = vmatpush.bf16.msra.mxu0 %v313
    %721 = vmatmul.bf16.gmra.mxu0 %v649
    %v722 = vpop.f32.mrf.mxu0
    %v723 = vadd.f32 %v396, %v722
    %v724 = vpop.f32.mrf.mxu0
    %v725 = vadd.f32 %v401, %v724
    %726 = vmatmul.bf16.gmra.mxu0 %v651
    %v727 = vpop.f32.mrf.mxu0
    %v728 = vadd.f32 %v406, %v727
    %v729 = vpop.f32.mrf.mxu0
    %v730 = vadd.f32 %v411, %v729
    %731 = vmatmul.bf16.gmra.mxu0 %v653
    %v732 = vpop.f32.mrf.mxu0
    %v733 = vadd.f32 %v416, %v732
    %v734 = vpop.f32.mrf.mxu0
    %v735 = vadd.f32 %v421, %v734
    %736 = vmatmul.bf16.gmra.mxu0 %v655
    %v737 = vpop.f32.mrf.mxu0
    %v738 = vadd.f32 %v426, %v737
    %v739 = vpop.f32.mrf.mxu0
    %v740 = vadd.f32 %v431, %v739
    %741 = vmatmul.bf16.gmra.mxu0 %v657
    %v742 = vpop.f32.mrf.mxu0
    %v743 = vadd.f32 %v436, %v742
    %v744 = vpop.f32.mrf.mxu0
    %v745 = vadd.f32 %v441, %v744
    %746 = vmatmul.bf16.gmra.mxu0 %v659
    %v747 = vpop.f32.mrf.mxu0
    %v748 = vadd.f32 %v446, %v747
    %v749 = vpop.f32.mrf.mxu0
    %v750 = vadd.f32 %v451, %v749
    %751 = vmatmul.bf16.gmra.mxu0 %v661
    %v752 = vpop.f32.mrf.mxu0
    %v753 = vadd.f32 %v456, %v752
    %v754 = vpop.f32.mrf.mxu0
    %v755 = vadd.f32 %v461, %v754
    %756 = vmatmul.bf16.gmra.mxu0 %v663
    %v757 = vpop.f32.mrf.mxu0
    %v758 = vadd.f32 %v466, %v757
    %v759 = vpop.f32.mrf.mxu0
    %v760 = vadd.f32 %v471, %v759
    %761 = vmatmul.bf16.gmra.mxu0 %v665
    %v762 = vpop.f32.mrf.mxu0
    %v763 = vadd.f32 %v476, %v762
    %v764 = vpop.f32.mrf.mxu0
    %v765 = vadd.f32 %v481, %v764
    %766 = vmatmul.bf16.gmra.mxu0 %v667
    %v767 = vpop.f32.mrf.mxu0
    %v768 = vadd.f32 %v486, %v767
    %v769 = vpop.f32.mrf.mxu0
    %v770 = vadd.f32 %v491, %v769
    %771 = vmatmul.bf16.gmra.mxu0 %v669
    %v772 = vpop.f32.mrf.mxu0
    %v773 = vadd.f32 %v496, %v772
    %v774 = vpop.f32.mrf.mxu0
    %v775 = vadd.f32 %v501, %v774
    %776 = vmatmul.bf16.gmra.mxu0 %v671
    %v777 = vpop.f32.mrf.mxu0
    %v778 = vadd.f32 %v506, %v777
    %v779 = vpop.f32.mrf.mxu0
    %v780 = vadd.f32 %v511, %v779
    %781 = vmatmul.bf16.gmra.mxu0 %v673
    %v782 = vpop.f32.mrf.mxu0
    %v783 = vadd.f32 %v516, %v782
    %v784 = vpop.f32.mrf.mxu0
    %v785 = vadd.f32 %v521, %v784
    %786 = vmatmul.bf16.gmra.mxu0 %v675
    %v787 = vpop.f32.mrf.mxu0
    %v788 = vadd.f32 %v526, %v787
    %v789 = vpop.f32.mrf.mxu0
    %v790 = vadd.f32 %v531, %v789
    %791 = vmatmul.bf16.gmra.mxu0 %v677
    %v792 = vpop.f32.mrf.mxu0
    %v793 = vadd.f32 %v536, %v792
    %v794 = vpop.f32.mrf.mxu0
    %v795 = vadd.f32 %v541, %v794
    %796 = vmatmul.bf16.gmra.mxu0 %v679
    %v797 = vpop.f32.mrf.mxu0
    %v798 = vadd.f32 %v546, %v797
    %v799 = vpop.f32.mrf.mxu0
    %v800 = vadd.f32 %v551, %v799
    %801 = vdwg.mxu0
    %802 = vmatpush.bf16.msra.mxu0 %v328
    %803 = vmatpush.bf16.msra.mxu0 %v327
    %804 = vmatpush.bf16.msra.mxu0 %v326
    %805 = vmatpush.bf16.msra.mxu0 %v325
    %806 = vmatpush.bf16.msra.mxu0 %v324
    %807 = vmatpush.bf16.msra.mxu0 %v323
    %808 = vmatpush.bf16.msra.mxu0 %v322
    %809 = vmatpush.bf16.msra.mxu0 %v321
    %810 = vmatmul.bf16.gmra.mxu0 %v650
    %v811 = vpop.f32.mrf.mxu0
    %v812 = vadd.f32 %v723, %v811
    %v813 = vpop.f32.mrf.mxu0
    %v814 = vadd.f32 %v725, %v813
    %815 = vmatmul.bf16.gmra.mxu0 %v652
    %v816 = vpop.f32.mrf.mxu0
    %v817 = vadd.f32 %v728, %v816
    %v818 = vpop.f32.mrf.mxu0
    %v819 = vadd.f32 %v730, %v818
    %820 = vmatmul.bf16.gmra.mxu0 %v654
    %v821 = vpop.f32.mrf.mxu0
    %v822 = vadd.f32 %v733, %v821
    %v823 = vpop.f32.mrf.mxu0
    %v824 = vadd.f32 %v735, %v823
    %825 = vmatmul.bf16.gmra.mxu0 %v656
    %v826 = vpop.f32.mrf.mxu0
    %v827 = vadd.f32 %v738, %v826
    %v828 = vpop.f32.mrf.mxu0
    %v829 = vadd.f32 %v740, %v828
    %830 = vmatmul.bf16.gmra.mxu0 %v658
    %v831 = vpop.f32.mrf.mxu0
    %v832 = vadd.f32 %v743, %v831
    %v833 = vpop.f32.mrf.mxu0
    %v834 = vadd.f32 %v745, %v833
    %835 = vmatmul.bf16.gmra.mxu0 %v660
    %v836 = vpop.f32.mrf.mxu0
    %v837 = vadd.f32 %v748, %v836
    %v838 = vpop.f32.mrf.mxu0
    %v839 = vadd.f32 %v750, %v838
    %840 = vmatmul.bf16.gmra.mxu0 %v662
    %v841 = vpop.f32.mrf.mxu0
    %v842 = vadd.f32 %v753, %v841
    %v843 = vpop.f32.mrf.mxu0
    %v844 = vadd.f32 %v755, %v843
    %845 = vmatmul.bf16.gmra.mxu0 %v664
    %v846 = vpop.f32.mrf.mxu0
    %v847 = vadd.f32 %v758, %v846
    %v848 = vpop.f32.mrf.mxu0
    %v849 = vadd.f32 %v760, %v848
    %850 = vmatmul.bf16.gmra.mxu0 %v666
    %v851 = vpop.f32.mrf.mxu0
    %v852 = vadd.f32 %v763, %v851
    %v853 = vpop.f32.mrf.mxu0
    %v854 = vadd.f32 %v765, %v853
    %855 = vmatmul.bf16.gmra.mxu0 %v668
    %v856 = vpop.f32.mrf.mxu0
    %v857 = vadd.f32 %v768, %v856
    %v858 = vpop.f32.mrf.mxu0
    %v859 = vadd.f32 %v770, %v858
    %860 = vmatmul.bf16.gmra.mxu0 %v670
    %v861 = vpop.f32.mrf.mxu0
    %v862 = vadd.f32 %v773, %v861
    %v863 = vpop.f32.mrf.mxu0
    %v864 = vadd.f32 %v775, %v863
    %865 = vmatmul.bf16.gmra.mxu0 %v672
    %v866 = vpop.f32.mrf.mxu0
    %v867 = vadd.f32 %v778, %v866
    %v868 = vpop.f32.mrf.mxu0
    %v869 = vadd.f32 %v780, %v868
    %870 = vmatmul.bf16.gmra.mxu0 %v674
    %v871 = vpop.f32.mrf.mxu0
    %v872 = vadd.f32 %v783, %v871
    %v873 = vpop.f32.mrf.mxu0
    %v874 = vadd.f32 %v785, %v873
    %875 = vmatmul.bf16.gmra.mxu0 %v676
    %v876 = vpop.f32.mrf.mxu0
    %v877 = vadd.f32 %v788, %v876
    %v878 = vpop.f32.mrf.mxu0
    %v879 = vadd.f32 %v790, %v878
    %880 = vmatmul.bf16.gmra.mxu0 %v678
    %v881 = vpop.f32.mrf.mxu0
    %v882 = vadd.f32 %v793, %v881
    %v883 = vpop.f32.mrf.mxu0
    %v884 = vadd.f32 %v795, %v883
    %885 = vmatmul.bf16.gmra.mxu0 %v680
    %v886 = vpop.f32.mrf.mxu0
    %v887 = vadd.f32 %v798, %v886
    %v888 = vpop.f32.mrf.mxu0
    %v889 = vadd.f32 %v800, %v888
    %890 = vdwg.mxu0
    %v891 = vmax.f32 %v812, 0.0
    %v892 = vmax.f32 %v814, 0.0
    %v893 = vmax.f32 %v817, 0.0
    %v894 = vmax.f32 %v819, 0.0
    %v895 = vmax.f32 %v822, 0.0
    %v896 = vmax.f32 %v824, 0.0
    %v897 = vmax.f32 %v827, 0.0
    %v898 = vmax.f32 %v829, 0.0
    %v899 = vmax.f32 %v832, 0.0
    %v900 = vmax.f32 %v834, 0.0
    %v901 = vmax.f32 %v837, 0.0
    %v902 = vmax.f32 %v839, 0.0
    %v903 = vmax.f32 %v842, 0.0
    %v904 = vmax.f32 %v844, 0.0
    %v905 = vmax.f32 %v847, 0.0
    %v906 = vmax.f32 %v849, 0.0
    %v907 = vmax.f32 %v852, 0.0
    %v908 = vmax.f32 %v854, 0.0
    %v909 = vmax.f32 %v857, 0.0
    %v910 = vmax.f32 %v859, 0.0
    %v911 = vmax.f32 %v862, 0.0
    %v912 = vmax.f32 %v864, 0.0
    %v913 = vmax.f32 %v867, 0.0
    %v914 = vmax.f32 %v869, 0.0
    %v915 = vmax.f32 %v872, 0.0
    %v916 = vmax.f32 %v874, 0.0
    %v917 = vmax.f32 %v877, 0.0
    %v918 = vmax.f32 %v879, 0.0
    %v919 = vmax.f32 %v882, 0.0
    %v920 = vmax.f32 %v884, 0.0
    %v921 = vmax.f32 %v887, 0.0
    %v922 = vmax.f32 %v889, 0.0
    %v923 = vpack.c.bf16 %v892, %v891
    %v924 = vpack.c.bf16 %v894, %v893
    %v925 = vpack.c.bf16 %v896, %v895
    %v926 = vpack.c.bf16 %v898, %v897
    %v927 = vpack.c.bf16 %v900, %v899
    %v928 = vpack.c.bf16 %v902, %v901
    %v929 = vpack.c.bf16 %v904, %v903
    %v930 = vpack.c.bf16 %v906, %v905
    %v931 = vpack.c.bf16 %v908, %v907
    %v932 = vpack.c.bf16 %v910, %v909
    %v933 = vpack.c.bf16 %v912, %v911
    %v934 = vpack.c.bf16 %v914, %v913
    %v935 = vpack.c.bf16 %v916, %v915
    %v936 = vpack.c.bf16 %v918, %v917
    %v937 = vpack.c.bf16 %v920, %v919
    %v938 = vpack.c.bf16 %v922, %v921
    %v939 = vld [vmem:[%s4] sm:$0xff]
    %v941 = vunpack.c.l.b16 %v939
    %v942 = vunpack.c.h.b16 %v939
    %v943 = vpack.c.b16 %v941, %v941
    %v944 = vpack.c.b16 %v942, %v942
    %947 = vmatpush.bf16.msra.mxu0 %v930
    %948 = vmatpush.bf16.msra.mxu0 %v929
    %949 = vmatpush.bf16.msra.mxu0 %v928
    %950 = vmatpush.bf16.msra.mxu0 %v927
    %951 = vmatpush.bf16.msra.mxu0 %v926
    %952 = vmatpush.bf16.msra.mxu0 %v925
    %953 = vmatpush.bf16.msra.mxu0 %v924
    %954 = vmatpush.bf16.msra.mxu0 %v923
    %955 = vmatmul.bf16.gmra.mxu0 %v943
    %v956 = vpop.f32.mrf.mxu0
    %v957 = vadd.f32 0.0, %v956
    %v958 = vpop.f32.mrf.mxu0
    %959 = vdwg.mxu0
    %960 = vmatpush.bf16.msra.mxu0 %v938
    %961 = vmatpush.bf16.msra.mxu0 %v937
    %962 = vmatpush.bf16.msra.mxu0 %v936
    %963 = vmatpush.bf16.msra.mxu0 %v935
    %964 = vmatpush.bf16.msra.mxu0 %v934
    %965 = vmatpush.bf16.msra.mxu0 %v933
    %966 = vmatpush.bf16.msra.mxu0 %v932
    %967 = vmatpush.bf16.msra.mxu0 %v931
    %968 = vmatmul.bf16.gmra.mxu0 %v944
    %v969 = vpop.f32.mrf.mxu0
    %v970 = vadd.f32 %v957, %v969
    %v971 = vpop.f32.mrf.mxu0
    %972 = vdwg.mxu0
    %s973 = sld [smem:[#allocation2]]
    %v974 = vstv %s973
    %v975 = vadd.f32 %v970, %v974
    %976 = vst [vmem:[#allocation3] sm:$0x1] %v975
    // Predicated region
    $region26: #{tpu_custom_call.1} parent=1 // pred_check
      _
    $region27: #{tpu_custom_call.1} parent=1 // pred_check_branch
      %978 = sbr.rel (0) target = $region29
    $region28: #{tpu_custom_call.1} parent=1 // pred_region
      %980 = vsyncadd [#allocation4], 0
      %s982 = sshll.u32 [#allocation3], 4
      %s983 = int_to_ptr.vmem [resolvable:$true] %s982
      %s984 = sshll.u32 %s6, 4
      %s985 = int_to_ptr.hbm [resolvable:$true] %s984
      %987 = dma.vmem_to_hbm [thread:$0]  %s983, 16, %s985, [#allocation4]
    $region29: #{tpu_custom_call.1} parent=1 // pred_fallthru
      _
    // Predicated region
    $region30: #{tpu_custom_call.1} parent=1 // pred_check
      _
    $region31: #{tpu_custom_call.1} parent=1 // pred_check_branch
      %989 = sbr.rel (0) target = $region33
    $region32: #{tpu_custom_call.1} parent=1 // pred_region
      %991 = dma.done [#allocation4], 16
    $region33: #{tpu_custom_call.1} parent=1 // pred_fallthru
      _
    %992 = vsyncpa [#allocation4], 1

</llo_original>
